<compile_context>
chip_gen: v6e
topology: v6e:2x2x1
jax: 0.10.0
libtpu: 0.0.40
codegen_flags: <defaults>
</compile_context>

<pallas_src>
import functools

import jax
import jax.numpy as jnp
from jax.experimental import pallas as pl
from jax.experimental.pallas import tpu as pltpu


def _criticq_kernel(x_ref, w1_ref, b1_ref, w2_ref, b2_ref,
                    w3_ref, b3_ref, w4_ref, b4_ref, o_ref):
    """Packed 4-layer MLP: 4 MXU matmuls + VPU bias/ReLU on full-lane tiles."""
    h = jnp.dot(x_ref[...], w1_ref[...],
                preferred_element_type=jnp.float32) + b1_ref[...]
    h = jnp.maximum(h, 0.0)
    h = jnp.dot(h, w2_ref[...],
                preferred_element_type=jnp.float32) + b2_ref[...]
    h = jnp.maximum(h, 0.0)
    h = jnp.dot(h, w3_ref[...],
                preferred_element_type=jnp.float32) + b3_ref[...]
    h = jnp.maximum(h, 0.0)
    # Block-diagonal final layer: (block_p, P*mid) @ (P*mid, P) -> (block_p, P).
    # Column j of the result is q1 of packed sample j of each row.
    q = jnp.dot(h, w4_ref[...], preferred_element_type=jnp.float32) + b4_ref[0]
    o_ref[...] = q.astype(o_ref.dtype)


def _round_up(n, m):
    return ((n + m - 1) // m) * m


def _pick_pack(in_dim, mid_dim):
    """Samples packed per vreg row so both in_dim and mid_dim fit in 128 lanes."""
    return max(1, 128 // max(in_dim, mid_dim))


def _pick_block_p(b_pack):
    """Packed-row tile size (second-to-last dim of every activation block)."""
    if b_pack <= 512:
        return b_pack            # single tile; full-dim blocks are always legal
    # For big B: >= ~4 grid steps (two v7x TensorCores x pipelining), 128-row
    # multiples for clean tiling, capped at 2048 packed rows (= 8192 samples)
    # so the double-buffered x tile + f32 intermediates stay ~6 MiB -- far
    # below even v5e's 16 MiB scoped-VMEM default.
    return min(_round_up(pl.cdiv(b_pack, 4), 128), 2048)


def _block_diag(w, p):
    """(d_in, d_out) -> (p*d_in, p*d_out) with w repeated along the diagonal."""
    if p == 1:
        return w
    d_in, d_out = w.shape
    eye = jnp.eye(p, dtype=w.dtype)
    return jnp.einsum("ij,kl->ikjl", eye, w).reshape(p * d_in, p * d_out)


@functools.partial(jax.jit, static_argnames=("block_p", "x_bf16"))
def criticq_forward(x, params, *, block_p=None, x_bf16=False):
    """value: (B, state_dim + action_dim) f32 -> q1: (B, 1) f32."""
    w1, b1, w2, b2, w3, b3, w4, b4 = params
    B, in_dim = x.shape
    mid = w1.shape[1]

    # ---- lane packing: P samples per (up to) 128-lane row -------------------
    P = _pick_pack(in_dim, mid)
    pad = (-B) % P
    if pad:  # rare ragged-by-P batch; only then is x copied (by a few rows)
        x = jnp.concatenate([x, jnp.zeros((pad, in_dim), x.dtype)], axis=0)
    b_pack = (B + pad) // P
    x_packed = x.reshape(b_pack, P * in_dim)        # contiguous row-major merge
    if x_bf16:  # optional: halve the dominant HBM stream (v6e/v7x)
        x_packed = x_packed.astype(jnp.bfloat16)

    # Block-diagonal / tiled parameters (tiny: <= (P*mid)^2 floats each).
    # In production, pack these once outside the step instead of per call.
    w1b = _block_diag(w1, P).astype(x_packed.dtype)
    w2b, w3b, w4b = _block_diag(w2, P), _block_diag(w3, P), _block_diag(w4, P)
    b1b, b2b, b3b = (jnp.tile(b, (1, P)) for b in (b1, b2, b3))
    b4s = b4.reshape((1,))                          # scalar bias -> SMEM

    # ---- batch tiling --------------------------------------------------------
    if block_p is None:
        block_p = _pick_block_p(b_pack)
    block_p = min(max(8, _round_up(block_p, 8)), _round_up(b_pack, 8))
    if block_p >= b_pack:
        block_p = b_pack                            # one full block
    grid_p = pl.cdiv(b_pack, block_p)

    # Tiny resident weights/biases: full blocks with a constant index_map.
    def resident(a):
        return pl.BlockSpec(a.shape, lambda i: (0,) * a.ndim)

    cost = pl.CostEstimate(
        flops=2 * B * (in_dim * mid + 2 * mid * mid + mid),
        transcendentals=0,
        bytes_accessed=(x_packed.size * x_packed.dtype.itemsize + B * 4
                        + sum(a.size * 4
                              for a in (w1b, b1b, w2b, b2b, w3b, b3b, w4b))),
    )

    out = pl.pallas_call(
        _criticq_kernel,
        out_shape=jax.ShapeDtypeStruct((b_pack, P), jnp.float32),
        grid_spec=pltpu.PrefetchScalarGridSpec(
            num_scalar_prefetch=0,
            grid=(grid_p,),
            in_specs=[
                pl.BlockSpec((block_p, P * in_dim), lambda i: (i, 0)),  # x tile
                resident(w1b), resident(b1b),
                resident(w2b), resident(b2b),
                resident(w3b), resident(b3b),
                resident(w4b),
                pl.BlockSpec(memory_space=pltpu.MemorySpace.SMEM),      # b4
            ],
            out_specs=pl.BlockSpec((block_p, P), lambda i: (i, 0)),
        ),
        compiler_params=pltpu.CompilerParams(
            dimension_semantics=("parallel",)),
        cost_estimate=cost,
    )(x_packed, w1b, b1b, w2b, b2b, w3b, b3b, w4b, b4s)

    # (b_pack, P) -> (B+pad, 1) is a contiguous merge; drop the pad rows.
    return out.reshape(b_pack * P, 1)[:B]


def init_criticq_params(key, state_dim, action_dim, mid_dim):
    """PyTorch-Linear-style init: U(-1/sqrt(fan_in), 1/sqrt(fan_in)).

    Weights are stored (in_features, out_features), i.e. y = x @ W + b."""
    dims = [
        (state_dim + action_dim, mid_dim),  # net_head Linear 1
        (mid_dim, mid_dim),                 # net_head Linear 2
        (mid_dim, mid_dim),                 # net_q1 Linear 1
        (mid_dim, 1),                       # net_q1 Linear 2
    ]
    params = []
    for fan_in, fan_out in dims:
        key, kw, kb = jax.random.split(key, 3)
        bound = 1.0 / (fan_in ** 0.5)
        w = jax.random.uniform(kw, (fan_in, fan_out), jnp.float32, -bound, bound)
        b = jax.random.uniform(kb, (1, fan_out), jnp.float32, -bound, bound)
        params += [w, b]
    return tuple(params)


def criticq_reference(x, params):
    """Ground-truth forward (true-f32 matmuls)."""
    w1, b1, w2, b2, w3, b3, w4, b4 = params
    hp = jax.lax.Precision.HIGHEST
    h = jnp.maximum(jnp.dot(x, w1, precision=hp) + b1, 0.0)
    h = jnp.maximum(jnp.dot(h, w2, precision=hp) + b2, 0.0)
    h = jnp.maximum(jnp.dot(h, w3, precision=hp) + b3, 0.0)
    return jnp.dot(h, w4, precision=hp) + b4


if __name__ == "__main__":
    # Shapes consistent with the module: state_dim=24, action_dim=8
    # (state+action=32), mid_dim=32  ->  pack factor P=4.
    state_dim, action_dim, mid_dim = 24, 8, 32

    key = jax.random.PRNGKey(0)
    key, kp = jax.random.split(key)
    params = init_criticq_params(kp, state_dim, action_dim, mid_dim)

    # batch=8   : tiny single-block path (B % 4 == 0, b_pack = 2)
    # batch=301 : ragged-by-pack path (3 pad rows), single block
    # batch=2056: multi-block grid (grid = 3) with a partial final tile
    for batch in (8, 301, 2056):
        key, kx = jax.random.split(key)
        value = jax.random.normal(kx, (batch, state_dim + action_dim), jnp.float32)

        q1 = jax.block_until_ready(criticq_forward(value, params))
        ref = criticq_reference(value, params)

        assert q1.shape == (batch, 1), q1.shape
        # Tolerance covers XLA-TPU's default reduced-precision f32 MXU passes
        # on either side of the comparison; structural bugs would be O(0.1-1).
        err = float(jnp.max(jnp.abs(q1 - ref)))
        assert jnp.allclose(q1, ref, atol=2e-2, rtol=2e-2), err

    print("KERNEL_OK")
</pallas_src>

<mosaic_0001>
module attributes {stable_mosaic.version = 11 : i64} {
  func.func @_criticq_kernel(%arg0: i32, %arg1: memref<2x128xf32, #tpu.memory_space<vmem>>, %arg2: memref<128x128xf32, #tpu.memory_space<vmem>>, %arg3: memref<1x128xf32, #tpu.memory_space<vmem>>, %arg4: memref<128x128xf32, #tpu.memory_space<vmem>>, %arg5: memref<1x128xf32, #tpu.memory_space<vmem>>, %arg6: memref<128x128xf32, #tpu.memory_space<vmem>>, %arg7: memref<1x128xf32, #tpu.memory_space<vmem>>, %arg8: memref<128x4xf32, #tpu.memory_space<vmem>>, %arg9: memref<1xf32, #tpu.memory_space<smem>>, %arg10: memref<2x4xf32, #tpu.memory_space<vmem>>) attributes {dimension_semantics = [#tpu.dimension_semantics<parallel>], iteration_bounds = array<i64: 1>, scalar_prefetch = 0 : i64, scratch_operands = 0 : i64, tpu.core_type = #tpu.core_type<tc>, window_params = [{transform_indices = @transform_0, window_bounds = array<i64: 2, 128>}, {pipeline_mode = #tpu.pipeline_mode<synchronous>, transform_indices = @transform_1, window_bounds = array<i64: 128, 128>}, {pipeline_mode = #tpu.pipeline_mode<synchronous>, transform_indices = @transform_2, window_bounds = array<i64: 1, 128>}, {pipeline_mode = #tpu.pipeline_mode<synchronous>, transform_indices = @transform_3, window_bounds = array<i64: 128, 128>}, {pipeline_mode = #tpu.pipeline_mode<synchronous>, transform_indices = @transform_4, window_bounds = array<i64: 1, 128>}, {pipeline_mode = #tpu.pipeline_mode<synchronous>, transform_indices = @transform_5, window_bounds = array<i64: 128, 128>}, {pipeline_mode = #tpu.pipeline_mode<synchronous>, transform_indices = @transform_6, window_bounds = array<i64: 1, 128>}, {pipeline_mode = #tpu.pipeline_mode<synchronous>, transform_indices = @transform_7, window_bounds = array<i64: 128, 4>}, {transform_indices = @transform_8, window_bounds = array<i64: 1>}, {transform_indices = @transform_9, window_bounds = array<i64: 2, 4>}]} {
    %c0 = arith.constant 0 : index
    %c0_0 = arith.constant 0 : index
    %0 = vector.load %arg1[%c0, %c0_0] : memref<2x128xf32, #tpu.memory_space<vmem>>, vector<2x128xf32>
    %c0_1 = arith.constant 0 : index
    %c0_2 = arith.constant 0 : index
    %1 = vector.load %arg2[%c0_1, %c0_2] : memref<128x128xf32, #tpu.memory_space<vmem>>, vector<128x128xf32>
    %cst = arith.constant dense<0.000000e+00> : vector<2x128xf32>
    %2 = tpu.matmul %0, %1, %cst {dimension_numbers = #tpu.dot_dimension_numbers<[1], [0], [0], [1], [0, 0, 1, 1], [], []>} : vector<2x128xf32>, vector<128x128xf32>, vector<2x128xf32> -> vector<2x128xf32>
    %c0_3 = arith.constant 0 : index
    %c0_4 = arith.constant 0 : index
    %3 = vector.load %arg3[%c0_3, %c0_4] : memref<1x128xf32, #tpu.memory_space<vmem>>, vector<1x128xf32>
    %4 = vector.broadcast %3 : vector<1x128xf32> to vector<2x128xf32>
    %5 = arith.addf %2, %4 : vector<2x128xf32>
    %cst_5 = arith.constant 0.000000e+00 : f32
    %6 = vector.broadcast %cst_5 : f32 to vector<2x128xf32>
    %7 = arith.maximumf %5, %6 : vector<2x128xf32>
    %c0_6 = arith.constant 0 : index
    %c0_7 = arith.constant 0 : index
    %8 = vector.load %arg4[%c0_6, %c0_7] : memref<128x128xf32, #tpu.memory_space<vmem>>, vector<128x128xf32>
    %cst_8 = arith.constant dense<0.000000e+00> : vector<2x128xf32>
    %9 = tpu.matmul %7, %8, %cst_8 {dimension_numbers = #tpu.dot_dimension_numbers<[1], [0], [0], [1], [0, 0, 1, 1], [], []>} : vector<2x128xf32>, vector<128x128xf32>, vector<2x128xf32> -> vector<2x128xf32>
    %c0_9 = arith.constant 0 : index
    %c0_10 = arith.constant 0 : index
    %10 = vector.load %arg5[%c0_9, %c0_10] : memref<1x128xf32, #tpu.memory_space<vmem>>, vector<1x128xf32>
    %11 = vector.broadcast %10 : vector<1x128xf32> to vector<2x128xf32>
    %12 = arith.addf %9, %11 : vector<2x128xf32>
    %cst_11 = arith.constant 0.000000e+00 : f32
    %13 = vector.broadcast %cst_11 : f32 to vector<2x128xf32>
    %14 = arith.maximumf %12, %13 : vector<2x128xf32>
    %c0_12 = arith.constant 0 : index
    %c0_13 = arith.constant 0 : index
    %15 = vector.load %arg6[%c0_12, %c0_13] : memref<128x128xf32, #tpu.memory_space<vmem>>, vector<128x128xf32>
    %cst_14 = arith.constant dense<0.000000e+00> : vector<2x128xf32>
    %16 = tpu.matmul %14, %15, %cst_14 {dimension_numbers = #tpu.dot_dimension_numbers<[1], [0], [0], [1], [0, 0, 1, 1], [], []>} : vector<2x128xf32>, vector<128x128xf32>, vector<2x128xf32> -> vector<2x128xf32>
    %c0_15 = arith.constant 0 : index
    %c0_16 = arith.constant 0 : index
    %17 = vector.load %arg7[%c0_15, %c0_16] : memref<1x128xf32, #tpu.memory_space<vmem>>, vector<1x128xf32>
    %18 = vector.broadcast %17 : vector<1x128xf32> to vector<2x128xf32>
    %19 = arith.addf %16, %18 : vector<2x128xf32>
    %cst_17 = arith.constant 0.000000e+00 : f32
    %20 = vector.broadcast %cst_17 : f32 to vector<2x128xf32>
    %21 = arith.maximumf %19, %20 : vector<2x128xf32>
    %c0_18 = arith.constant 0 : index
    %c0_19 = arith.constant 0 : index
    %22 = vector.load %arg8[%c0_18, %c0_19] : memref<128x4xf32, #tpu.memory_space<vmem>>, vector<128x4xf32>
    %cst_20 = arith.constant dense<0.000000e+00> : vector<2x4xf32>
    %23 = tpu.matmul %21, %22, %cst_20 {dimension_numbers = #tpu.dot_dimension_numbers<[1], [0], [0], [1], [0, 0, 1, 1], [], []>} : vector<2x128xf32>, vector<128x4xf32>, vector<2x4xf32> -> vector<2x4xf32>
    %c0_21 = arith.constant 0 : index
    %24 = memref.load %arg9[%c0_21] : memref<1xf32, #tpu.memory_space<smem>>
    %25 = vector.broadcast %24 : f32 to vector<2x4xf32>
    %26 = arith.addf %23, %25 : vector<2x4xf32>
    %c0_22 = arith.constant 0 : index
    %c0_23 = arith.constant 0 : index
    %27 = vector.load %arg10[%c0_22, %c0_23] : memref<2x4xf32, #tpu.memory_space<vmem>>, vector<2x4xf32>
    tpu.vector_store %arg10[%c0_22, %c0_23], %26 {strides = array<i32>} : memref<2x4xf32, #tpu.memory_space<vmem>>, vector<2x4xf32>,
    return
  }
  func.func @transform_0(%arg0: i32) -> (i32, i32) {
    %c0_i32 = arith.constant 0 : i32
    %c0_i32_0 = arith.constant 0 : i32
    return %arg0, %c0_i32 : i32, i32
  }
  func.func @transform_1(%arg0: i32) -> (i32, i32) {
    %c0_i32 = arith.constant 0 : i32
    %c0_i32_0 = arith.constant 0 : i32
    %c0_i32_1 = arith.constant 0 : i32
    return %c0_i32, %c0_i32_0 : i32, i32
  }
  func.func @transform_2(%arg0: i32) -> (i32, i32) {
    %c0_i32 = arith.constant 0 : i32
    %c0_i32_0 = arith.constant 0 : i32
    %c0_i32_1 = arith.constant 0 : i32
    return %c0_i32, %c0_i32_0 : i32, i32
  }
  func.func @transform_3(%arg0: i32) -> (i32, i32) {
    %c0_i32 = arith.constant 0 : i32
    %c0_i32_0 = arith.constant 0 : i32
    %c0_i32_1 = arith.constant 0 : i32
    return %c0_i32, %c0_i32_0 : i32, i32
  }
  func.func @transform_4(%arg0: i32) -> (i32, i32) {
    %c0_i32 = arith.constant 0 : i32
    %c0_i32_0 = arith.constant 0 : i32
    %c0_i32_1 = arith.constant 0 : i32
    return %c0_i32, %c0_i32_0 : i32, i32
  }
  func.func @transform_5(%arg0: i32) -> (i32, i32) {
    %c0_i32 = arith.constant 0 : i32
    %c0_i32_0 = arith.constant 0 : i32
    %c0_i32_1 = arith.constant 0 : i32
    return %c0_i32, %c0_i32_0 : i32, i32
  }
  func.func @transform_6(%arg0: i32) -> (i32, i32) {
    %c0_i32 = arith.constant 0 : i32
    %c0_i32_0 = arith.constant 0 : i32
    %c0_i32_1 = arith.constant 0 : i32
    return %c0_i32, %c0_i32_0 : i32, i32
  }
  func.func @transform_7(%arg0: i32) -> (i32, i32) {
    %c0_i32 = arith.constant 0 : i32
    %c0_i32_0 = arith.constant 0 : i32
    %c0_i32_1 = arith.constant 0 : i32
    return %c0_i32, %c0_i32_0 : i32, i32
  }
  func.func @transform_8(%arg0: i32) -> i32 {
    %c0_i32 = arith.constant 0 : i32
    %c0_i32_0 = arith.constant 0 : i32
    return %c0_i32 : i32
  }
  func.func @transform_9(%arg0: i32) -> (i32, i32) {
    %c0_i32 = arith.constant 0 : i32
    %c0_i32_0 = arith.constant 0 : i32
    return %arg0, %c0_i32 : i32, i32
  }
}

</mosaic_0001>

<llo_original>
// kernel: criticq_forward.1
$region0: #{criticq_forward.1}
  #allocation0 [shape = 'u32[]', space=smem, size = 0x4, offset = 0x4, fixed_abs, tag = 'smem constant byte address 0x4 - core index']
  #allocation1 [shape = 'u32[144,128]{1,0:T(1,128)}', space=vmem, size = 0x12000, scoped, tag = 'internal scratch']
  #allocation2 [shape = 'f32[1]{0:T(128)S(6)}', space=smem, size = 0x200, scoped, tag = 'scoped memory for criticq_forward.1']
  %s0 = inlined_call_operand.vmem [shape: f32[2,128], index: 0, kind: input, shape index: {}]
  %s1 = inlined_call_operand.vmem [shape: f32[128,128], index: 1, kind: input, shape index: {}]
  %s2 = inlined_call_operand.vmem [shape: f32[1,128], index: 2, kind: input, shape index: {}]
  %s3 = inlined_call_operand.vmem [shape: f32[128,128], index: 3, kind: input, shape index: {}]
  %s4 = inlined_call_operand.vmem [shape: f32[1,128], index: 4, kind: input, shape index: {}]
  %s5 = inlined_call_operand.vmem [shape: f32[128,128], index: 5, kind: input, shape index: {}]
  %s6 = inlined_call_operand.vmem [shape: f32[1,128], index: 6, kind: input, shape index: {}]
  %s7 = inlined_call_operand.vmem [shape: f32[128,4], index: 7, kind: input, shape index: {}]
  %s8 = inlined_call_operand.<no memory space> [shape: f32[1], index: 8, kind: input, shape index: {}]
  %s9 = inlined_call_operand.vmem [shape: f32[2,4], index: 9, kind: output, shape index: {}]
  %s10 = sld [smem:[#allocation0]]
  $region46: #{criticq_forward.1} parent=0
    _
  %s12 = ssub.s32 1, %s10
  %s13 = scalar_select 0, %s12, %s10
  %14 = sst [smem:[#allocation2]] %s8
  // Predicated region
  $region2: #{criticq_forward.1} parent=0 // pred_check
    _
  $region3: #{criticq_forward.1} parent=0 // pred_check_branch
    %16 = sbr.rel (0) target = $region5
  $region4: #{criticq_forward.1} parent=0 // pred_region
    _
  $region5: #{criticq_forward.1} parent=0 // pred_fallthru
    _
  // Predicated region
  $region6: #{criticq_forward.1} parent=0 // pred_check
    _
  $region7: #{criticq_forward.1} parent=0 // pred_check_branch
    %18 = sbr.rel (0) target = $region9
  $region8: #{criticq_forward.1} parent=0 // pred_region
    _
  $region9: #{criticq_forward.1} parent=0 // pred_fallthru
    _
  // Predicated region
  $region10: #{criticq_forward.1} parent=0 // pred_check
    _
  $region11: #{criticq_forward.1} parent=0 // pred_check_branch
    %20 = sbr.rel (0) target = $region13
  $region12: #{criticq_forward.1} parent=0 // pred_region
    _
  $region13: #{criticq_forward.1} parent=0 // pred_fallthru
    _
  // Predicated region
  $region14: #{criticq_forward.1} parent=0 // pred_check
    _
  $region15: #{criticq_forward.1} parent=0 // pred_check_branch
    %22 = sbr.rel (0) target = $region17
  $region16: #{criticq_forward.1} parent=0 // pred_region
    _
  $region17: #{criticq_forward.1} parent=0 // pred_fallthru
    _
  // Predicated region
  $region18: #{criticq_forward.1} parent=0 // pred_check
    _
  $region19: #{criticq_forward.1} parent=0 // pred_check_branch
    %24 = sbr.rel (0) target = $region21
  $region20: #{criticq_forward.1} parent=0 // pred_region
    _
  $region21: #{criticq_forward.1} parent=0 // pred_fallthru
    _
  // Predicated region
  $region22: #{criticq_forward.1} parent=0 // pred_check
    _
  $region23: #{criticq_forward.1} parent=0 // pred_check_branch
    %26 = sbr.rel (0) target = $region25
  $region24: #{criticq_forward.1} parent=0 // pred_region
    _
  $region25: #{criticq_forward.1} parent=0 // pred_fallthru
    _
  // Predicated region
  $region26: #{criticq_forward.1} parent=0 // pred_check
    _
  $region27: #{criticq_forward.1} parent=0 // pred_check_branch
    %28 = sbr.rel (0) target = $region29
  $region28: #{criticq_forward.1} parent=0 // pred_region
    _
  $region29: #{criticq_forward.1} parent=0 // pred_fallthru
    _
  // Predicated region
  $region30: #{criticq_forward.1} parent=0 // pred_check
    _
  $region31: #{criticq_forward.1} parent=0 // pred_check_branch
    %30 = sbr.rel (0) target = $region33
  $region32: #{criticq_forward.1} parent=0 // pred_region
    _
  $region33: #{criticq_forward.1} parent=0 // pred_fallthru
    _
  // Predicated region
  $region34: #{criticq_forward.1} parent=0 // pred_check
    _
  $region35: #{criticq_forward.1} parent=0 // pred_check_branch
    %32 = sbr.rel (0) target = $region37
  $region36: #{criticq_forward.1} parent=0 // pred_region
    _
  $region37: #{criticq_forward.1} parent=0 // pred_fallthru
    _
  %v33 = vld [vmem:[%s0] sm:$0x3]
  %v34 = vld [vmem:[%s1] sm:$0xff]
  %v35 = vld [vmem:[%s1 + $0x8] sm:$0xff]
  %v36 = vld [vmem:[%s1 + $0x10] sm:$0xff]
  %v37 = vld [vmem:[%s1 + $0x18] sm:$0xff]
  %v38 = vld [vmem:[%s1 + $0x20] sm:$0xff]
  %v39 = vld [vmem:[%s1 + $0x28] sm:$0xff]
  %v40 = vld [vmem:[%s1 + $0x30] sm:$0xff]
  %v41 = vld [vmem:[%s1 + $0x38] sm:$0xff]
  %v42 = vld [vmem:[%s1 + $0x40] sm:$0xff]
  %v43 = vld [vmem:[%s1 + $0x48] sm:$0xff]
  %v44 = vld [vmem:[%s1 + $0x50] sm:$0xff]
  %v45 = vld [vmem:[%s1 + $0x58] sm:$0xff]
  %v46 = vld [vmem:[%s1 + $0x60] sm:$0xff]
  %v47 = vld [vmem:[%s1 + $0x68] sm:$0xff]
  %v48 = vld [vmem:[%s1 + $0x70] sm:$0xff]
  %v49 = vld [vmem:[%s1 + $0x78] sm:$0xff]
  %v50 = vld [vmem:[%s2] sm:$0x1]
  %v52 = vlaneseq
  %v53 = vshrl.u32 %v52, 7
  %v54 = vsub.s32 0, %v53
  %v55 = vrot.slane %v50, %v54
  %57 = vmatprep.subr.mxu0 0.0
  %58 = vmatpush1.msra.mxu0 %v49
  %59 = vmatprep.subr.mxu0 0.0
  %60 = vmatpush1.msra.mxu0 %v48
  %61 = vmatprep.subr.mxu0 0.0
  %62 = vmatpush1.msra.mxu0 %v47
  %63 = vmatprep.subr.mxu0 0.0
  %64 = vmatpush1.msra.mxu0 %v46
  %65 = vmatprep.subr.mxu0 0.0
  %66 = vmatpush1.msra.mxu0 %v45
  %67 = vmatprep.subr.mxu0 0.0
  %68 = vmatpush1.msra.mxu0 %v44
  %69 = vmatprep.subr.mxu0 0.0
  %70 = vmatpush1.msra.mxu0 %v43
  %71 = vmatprep.subr.mxu0 0.0
  %72 = vmatpush1.msra.mxu0 %v42
  %73 = vmatprep.subr.mxu0 0.0
  %74 = vmatpush1.msra.mxu0 %v41
  %75 = vmatprep.subr.mxu0 0.0
  %76 = vmatpush1.msra.mxu0 %v40
  %77 = vmatprep.subr.mxu0 0.0
  %78 = vmatpush1.msra.mxu0 %v39
  %79 = vmatprep.subr.mxu0 0.0
  %80 = vmatpush1.msra.mxu0 %v38
  %81 = vmatprep.subr.mxu0 0.0
  %82 = vmatpush1.msra.mxu0 %v37
  %83 = vmatprep.subr.mxu0 0.0
  %84 = vmatpush1.msra.mxu0 %v36
  %85 = vmatprep.subr.mxu0 0.0
  %86 = vmatpush1.msra.mxu0 %v35
  %87 = vmatprep.subr.mxu0 0.0
  %88 = vmatpush1.msra.mxu0 %v34
  %89 = vmatprep.subr.mxu0 0.0
  %90 = vmatpush2.msra.mxu0 0.0
  %91 = vmatprep.subr.mxu0 0.0
  %92 = vmatpush2.msra.mxu0 0.0
  %93 = vmatprep.subr.mxu0 0.0
  %94 = vmatpush2.msra.mxu0 0.0
  %95 = vmatprep.subr.mxu0 0.0
  %96 = vmatpush2.msra.mxu0 0.0
  %97 = vmatprep.subr.mxu0 0.0
  %98 = vmatpush2.msra.mxu0 0.0
  %99 = vmatprep.subr.mxu0 0.0
  %100 = vmatpush2.msra.mxu0 0.0
  %101 = vmatprep.subr.mxu0 0.0
  %102 = vmatpush2.msra.mxu0 0.0
  %103 = vmatprep.subr.mxu0 0.0
  %104 = vmatpush2.msra.mxu0 0.0
  %105 = vmatprep.subr.mxu0 0.0
  %106 = vmatpush2.msra.mxu0 0.0
  %107 = vmatprep.subr.mxu0 0.0
  %108 = vmatpush2.msra.mxu0 0.0
  %109 = vmatprep.subr.mxu0 0.0
  %110 = vmatpush2.msra.mxu0 0.0
  %111 = vmatprep.subr.mxu0 0.0
  %112 = vmatpush2.msra.mxu0 0.0
  %113 = vmatprep.subr.mxu0 0.0
  %114 = vmatpush2.msra.mxu0 0.0
  %115 = vmatprep.subr.mxu0 0.0
  %116 = vmatpush2.msra.mxu0 0.0
  %117 = vmatprep.subr.mxu0 0.0
  %118 = vmatpush2.msra.mxu0 0.0
  %119 = vmatprep.subr.mxu0 0.0
  %120 = vmatpush2.msra.mxu0 0.0
  %121 = vmatprep.mubr.f32.mxu0 0.0
  %122 = vmatmul.mubr.f32.gmra.mxu0 %v33
  %v123 = vpop.f32.mrf.mxu0
  %v124 = vadd.f32 %v55, %v123
  %v125 = vpop.f32.mrf.mxu0
  %126 = vdwg.mxu0
  %v127 = vmax.f32 %v124, 0.0
  %v128 = vld [vmem:[%s3] sm:$0xff]
  %v129 = vld [vmem:[%s3 + $0x8] sm:$0xff]
  %v130 = vld [vmem:[%s3 + $0x10] sm:$0xff]
  %v131 = vld [vmem:[%s3 + $0x18] sm:$0xff]
  %v132 = vld [vmem:[%s3 + $0x20] sm:$0xff]
  %v133 = vld [vmem:[%s3 + $0x28] sm:$0xff]
  %v134 = vld [vmem:[%s3 + $0x30] sm:$0xff]
  %v135 = vld [vmem:[%s3 + $0x38] sm:$0xff]
  %v136 = vld [vmem:[%s3 + $0x40] sm:$0xff]
  %v137 = vld [vmem:[%s3 + $0x48] sm:$0xff]
  %v138 = vld [vmem:[%s3 + $0x50] sm:$0xff]
  %v139 = vld [vmem:[%s3 + $0x58] sm:$0xff]
  %v140 = vld [vmem:[%s3 + $0x60] sm:$0xff]
  %v141 = vld [vmem:[%s3 + $0x68] sm:$0xff]
  %v142 = vld [vmem:[%s3 + $0x70] sm:$0xff]
  %v143 = vld [vmem:[%s3 + $0x78] sm:$0xff]
  %v144 = vld [vmem:[%s4] sm:$0x1]
  %v146 = vlaneseq
  %v147 = vshrl.u32 %v146, 7
  %v148 = vsub.s32 0, %v147
  %v149 = vrot.slane %v144, %v148
  %151 = vmatprep.subr.mxu0 0.0
  %152 = vmatpush1.msra.mxu0 %v143
  %153 = vmatprep.subr.mxu0 0.0
  %154 = vmatpush1.msra.mxu0 %v142
  %155 = vmatprep.subr.mxu0 0.0
  %156 = vmatpush1.msra.mxu0 %v141
  %157 = vmatprep.subr.mxu0 0.0
  %158 = vmatpush1.msra.mxu0 %v140
  %159 = vmatprep.subr.mxu0 0.0
  %160 = vmatpush1.msra.mxu0 %v139
  %161 = vmatprep.subr.mxu0 0.0
  %162 = vmatpush1.msra.mxu0 %v138
  %163 = vmatprep.subr.mxu0 0.0
  %164 = vmatpush1.msra.mxu0 %v137
  %165 = vmatprep.subr.mxu0 0.0
  %166 = vmatpush1.msra.mxu0 %v136
  %167 = vmatprep.subr.mxu0 0.0
  %168 = vmatpush1.msra.mxu0 %v135
  %169 = vmatprep.subr.mxu0 0.0
  %170 = vmatpush1.msra.mxu0 %v134
  %171 = vmatprep.subr.mxu0 0.0
  %172 = vmatpush1.msra.mxu0 %v133
  %173 = vmatprep.subr.mxu0 0.0
  %174 = vmatpush1.msra.mxu0 %v132
  %175 = vmatprep.subr.mxu0 0.0
  %176 = vmatpush1.msra.mxu0 %v131
  %177 = vmatprep.subr.mxu0 0.0
  %178 = vmatpush1.msra.mxu0 %v130
  %179 = vmatprep.subr.mxu0 0.0
  %180 = vmatpush1.msra.mxu0 %v129
  %181 = vmatprep.subr.mxu0 0.0
  %182 = vmatpush1.msra.mxu0 %v128
  %183 = vmatprep.subr.mxu0 0.0
  %184 = vmatpush2.msra.mxu0 0.0
  %185 = vmatprep.subr.mxu0 0.0
  %186 = vmatpush2.msra.mxu0 0.0
  %187 = vmatprep.subr.mxu0 0.0
  %188 = vmatpush2.msra.mxu0 0.0
  %189 = vmatprep.subr.mxu0 0.0
  %190 = vmatpush2.msra.mxu0 0.0
  %191 = vmatprep.subr.mxu0 0.0
  %192 = vmatpush2.msra.mxu0 0.0
  %193 = vmatprep.subr.mxu0 0.0
  %194 = vmatpush2.msra.mxu0 0.0
  %195 = vmatprep.subr.mxu0 0.0
  %196 = vmatpush2.msra.mxu0 0.0
  %197 = vmatprep.subr.mxu0 0.0
  %198 = vmatpush2.msra.mxu0 0.0
  %199 = vmatprep.subr.mxu0 0.0
  %200 = vmatpush2.msra.mxu0 0.0
  %201 = vmatprep.subr.mxu0 0.0
  %202 = vmatpush2.msra.mxu0 0.0
  %203 = vmatprep.subr.mxu0 0.0
  %204 = vmatpush2.msra.mxu0 0.0
  %205 = vmatprep.subr.mxu0 0.0
  %206 = vmatpush2.msra.mxu0 0.0
  %207 = vmatprep.subr.mxu0 0.0
  %208 = vmatpush2.msra.mxu0 0.0
  %209 = vmatprep.subr.mxu0 0.0
  %210 = vmatpush2.msra.mxu0 0.0
  %211 = vmatprep.subr.mxu0 0.0
  %212 = vmatpush2.msra.mxu0 0.0
  %213 = vmatprep.subr.mxu0 0.0
  %214 = vmatpush2.msra.mxu0 0.0
  %215 = vmatprep.mubr.f32.mxu0 0.0
  %216 = vmatmul.mubr.f32.gmra.mxu0 %v127
  %v217 = vpop.f32.mrf.mxu0
  %v218 = vadd.f32 %v149, %v217
  %v219 = vpop.f32.mrf.mxu0
  %220 = vdwg.mxu0
  %v221 = vmax.f32 %v218, 0.0
  %v222 = vld [vmem:[%s5] sm:$0xff]
  %v223 = vld [vmem:[%s5 + $0x8] sm:$0xff]
  %v224 = vld [vmem:[%s5 + $0x10] sm:$0xff]
  %v225 = vld [vmem:[%s5 + $0x18] sm:$0xff]
  %v226 = vld [vmem:[%s5 + $0x20] sm:$0xff]
  %v227 = vld [vmem:[%s5 + $0x28] sm:$0xff]
  %v228 = vld [vmem:[%s5 + $0x30] sm:$0xff]
  %v229 = vld [vmem:[%s5 + $0x38] sm:$0xff]
  %v230 = vld [vmem:[%s5 + $0x40] sm:$0xff]
  %v231 = vld [vmem:[%s5 + $0x48] sm:$0xff]
  %v232 = vld [vmem:[%s5 + $0x50] sm:$0xff]
  %v233 = vld [vmem:[%s5 + $0x58] sm:$0xff]
  %v234 = vld [vmem:[%s5 + $0x60] sm:$0xff]
  %v235 = vld [vmem:[%s5 + $0x68] sm:$0xff]
  %v236 = vld [vmem:[%s5 + $0x70] sm:$0xff]
  %v237 = vld [vmem:[%s5 + $0x78] sm:$0xff]
  %v238 = vld [vmem:[%s6] sm:$0x1]
  %v240 = vlaneseq
  %v241 = vshrl.u32 %v240, 7
  %v242 = vsub.s32 0, %v241
  %v243 = vrot.slane %v238, %v242
  %245 = vmatprep.subr.mxu0 0.0
  %246 = vmatpush1.msra.mxu0 %v237
  %247 = vmatprep.subr.mxu0 0.0
  %248 = vmatpush1.msra.mxu0 %v236
  %249 = vmatprep.subr.mxu0 0.0
  %250 = vmatpush1.msra.mxu0 %v235
  %251 = vmatprep.subr.mxu0 0.0
  %252 = vmatpush1.msra.mxu0 %v234
  %253 = vmatprep.subr.mxu0 0.0
  %254 = vmatpush1.msra.mxu0 %v233
  %255 = vmatprep.subr.mxu0 0.0
  %256 = vmatpush1.msra.mxu0 %v232
  %257 = vmatprep.subr.mxu0 0.0
  %258 = vmatpush1.msra.mxu0 %v231
  %259 = vmatprep.subr.mxu0 0.0
  %260 = vmatpush1.msra.mxu0 %v230
  %261 = vmatprep.subr.mxu0 0.0
  %262 = vmatpush1.msra.mxu0 %v229
  %263 = vmatprep.subr.mxu0 0.0
  %264 = vmatpush1.msra.mxu0 %v228
  %265 = vmatprep.subr.mxu0 0.0
  %266 = vmatpush1.msra.mxu0 %v227
  %267 = vmatprep.subr.mxu0 0.0
  %268 = vmatpush1.msra.mxu0 %v226
  %269 = vmatprep.subr.mxu0 0.0
  %270 = vmatpush1.msra.mxu0 %v225
  %271 = vmatprep.subr.mxu0 0.0
  %272 = vmatpush1.msra.mxu0 %v224
  %273 = vmatprep.subr.mxu0 0.0
  %274 = vmatpush1.msra.mxu0 %v223
  %275 = vmatprep.subr.mxu0 0.0
  %276 = vmatpush1.msra.mxu0 %v222
  %277 = vmatprep.subr.mxu0 0.0
  %278 = vmatpush2.msra.mxu0 0.0
  %279 = vmatprep.subr.mxu0 0.0
  %280 = vmatpush2.msra.mxu0 0.0
  %281 = vmatprep.subr.mxu0 0.0
  %282 = vmatpush2.msra.mxu0 0.0
  %283 = vmatprep.subr.mxu0 0.0
  %284 = vmatpush2.msra.mxu0 0.0
  %285 = vmatprep.subr.mxu0 0.0
  %286 = vmatpush2.msra.mxu0 0.0
  %287 = vmatprep.subr.mxu0 0.0
  %288 = vmatpush2.msra.mxu0 0.0
  %289 = vmatprep.subr.mxu0 0.0
  %290 = vmatpush2.msra.mxu0 0.0
  %291 = vmatprep.subr.mxu0 0.0
  %292 = vmatpush2.msra.mxu0 0.0
  %293 = vmatprep.subr.mxu0 0.0
  %294 = vmatpush2.msra.mxu0 0.0
  %295 = vmatprep.subr.mxu0 0.0
  %296 = vmatpush2.msra.mxu0 0.0
  %297 = vmatprep.subr.mxu0 0.0
  %298 = vmatpush2.msra.mxu0 0.0
  %299 = vmatprep.subr.mxu0 0.0
  %300 = vmatpush2.msra.mxu0 0.0
  %301 = vmatprep.subr.mxu0 0.0
  %302 = vmatpush2.msra.mxu0 0.0
  %303 = vmatprep.subr.mxu0 0.0
  %304 = vmatpush2.msra.mxu0 0.0
  %305 = vmatprep.subr.mxu0 0.0
  %306 = vmatpush2.msra.mxu0 0.0
  %307 = vmatprep.subr.mxu0 0.0
  %308 = vmatpush2.msra.mxu0 0.0
  %309 = vmatprep.mubr.f32.mxu0 0.0
  %310 = vmatmul.mubr.f32.gmra.mxu0 %v221
  %v311 = vpop.f32.mrf.mxu0
  %v312 = vadd.f32 %v243, %v311
  %v313 = vpop.f32.mrf.mxu0
  %314 = vdwg.mxu0
  %v315 = vmax.f32 %v312, 0.0
  %v316 = vld [vmem:[%s7] sm:$0xff]
  %v317 = vld [vmem:[%s7 + $0x8] sm:$0xff]
  %v318 = vld [vmem:[%s7 + $0x10] sm:$0xff]
  %v319 = vld [vmem:[%s7 + $0x18] sm:$0xff]
  %v320 = vld [vmem:[%s7 + $0x20] sm:$0xff]
  %v321 = vld [vmem:[%s7 + $0x28] sm:$0xff]
  %v322 = vld [vmem:[%s7 + $0x30] sm:$0xff]
  %v323 = vld [vmem:[%s7 + $0x38] sm:$0xff]
  %v324 = vld [vmem:[%s7 + $0x40] sm:$0xff]
  %v325 = vld [vmem:[%s7 + $0x48] sm:$0xff]
  %v326 = vld [vmem:[%s7 + $0x50] sm:$0xff]
  %v327 = vld [vmem:[%s7 + $0x58] sm:$0xff]
  %v328 = vld [vmem:[%s7 + $0x60] sm:$0xff]
  %v329 = vld [vmem:[%s7 + $0x68] sm:$0xff]
  %v330 = vld [vmem:[%s7 + $0x70] sm:$0xff]
  %v331 = vld [vmem:[%s7 + $0x78] sm:$0xff]
  %s332 = sld [smem:[#allocation2]]
  %v333 = vstv %s332
  %334 = vmatprep.subr.mxu0 0.0
  %335 = vmatpush1.msra.mxu0 %v331
  %336 = vmatprep.subr.mxu0 0.0
  %337 = vmatpush1.msra.mxu0 %v330
  %338 = vmatprep.subr.mxu0 0.0
  %339 = vmatpush1.msra.mxu0 %v329
  %340 = vmatprep.subr.mxu0 0.0
  %341 = vmatpush1.msra.mxu0 %v328
  %342 = vmatprep.subr.mxu0 0.0
  %343 = vmatpush1.msra.mxu0 %v327
  %344 = vmatprep.subr.mxu0 0.0
  %345 = vmatpush1.msra.mxu0 %v326
  %346 = vmatprep.subr.mxu0 0.0
  %347 = vmatpush1.msra.mxu0 %v325
  %348 = vmatprep.subr.mxu0 0.0
  %349 = vmatpush1.msra.mxu0 %v324
  %350 = vmatprep.subr.mxu0 0.0
  %351 = vmatpush1.msra.mxu0 %v323
  %352 = vmatprep.subr.mxu0 0.0
  %353 = vmatpush1.msra.mxu0 %v322
  %354 = vmatprep.subr.mxu0 0.0
  %355 = vmatpush1.msra.mxu0 %v321
  %356 = vmatprep.subr.mxu0 0.0
  %357 = vmatpush1.msra.mxu0 %v320
  %358 = vmatprep.subr.mxu0 0.0
  %359 = vmatpush1.msra.mxu0 %v319
  %360 = vmatprep.subr.mxu0 0.0
  %361 = vmatpush1.msra.mxu0 %v318
  %362 = vmatprep.subr.mxu0 0.0
  %363 = vmatpush1.msra.mxu0 %v317
  %364 = vmatprep.subr.mxu0 0.0
  %365 = vmatpush1.msra.mxu0 %v316
  %366 = vmatprep.subr.mxu0 0.0
  %367 = vmatpush2.msra.mxu0 0.0
  %368 = vmatprep.subr.mxu0 0.0
  %369 = vmatpush2.msra.mxu0 0.0
  %370 = vmatprep.subr.mxu0 0.0
  %371 = vmatpush2.msra.mxu0 0.0
  %372 = vmatprep.subr.mxu0 0.0
  %373 = vmatpush2.msra.mxu0 0.0
  %374 = vmatprep.subr.mxu0 0.0
  %375 = vmatpush2.msra.mxu0 0.0
  %376 = vmatprep.subr.mxu0 0.0
  %377 = vmatpush2.msra.mxu0 0.0
  %378 = vmatprep.subr.mxu0 0.0
  %379 = vmatpush2.msra.mxu0 0.0
  %380 = vmatprep.subr.mxu0 0.0
  %381 = vmatpush2.msra.mxu0 0.0
  %382 = vmatprep.subr.mxu0 0.0
  %383 = vmatpush2.msra.mxu0 0.0
  %384 = vmatprep.subr.mxu0 0.0
  %385 = vmatpush2.msra.mxu0 0.0
  %386 = vmatprep.subr.mxu0 0.0
  %387 = vmatpush2.msra.mxu0 0.0
  %388 = vmatprep.subr.mxu0 0.0
  %389 = vmatpush2.msra.mxu0 0.0
  %390 = vmatprep.subr.mxu0 0.0
  %391 = vmatpush2.msra.mxu0 0.0
  %392 = vmatprep.subr.mxu0 0.0
  %393 = vmatpush2.msra.mxu0 0.0
  %394 = vmatprep.subr.mxu0 0.0
  %395 = vmatpush2.msra.mxu0 0.0
  %396 = vmatprep.subr.mxu0 0.0
  %397 = vmatpush2.msra.mxu0 0.0
  %398 = vmatprep.mubr.f32.mxu0 0.0
  %399 = vmatmul.mubr.f32.gmra.mxu0 %v315
  %v400 = vpop.f32.mrf.mxu0
  %v401 = vadd.f32 %v333, %v400
  %v402 = vpop.f32.mrf.mxu0
  %403 = vdwg.mxu0
  %vm404 = vcmask 25600
  %405 = vst.msk [vmem:[%s9] sm:$0x3] %vm404, %v401
  // Predicated region
  $region38: #{criticq_forward.1} parent=0 // pred_check
    _
  $region39: #{criticq_forward.1} parent=0 // pred_check_branch
    %407 = sbr.rel (0) target = $region41
  $region40: #{criticq_forward.1} parent=0 // pred_region
    _
  $region41: #{criticq_forward.1} parent=0 // pred_fallthru
    _
  // Predicated region
  $region42: #{criticq_forward.1} parent=0 // pred_check
    _
  $region43: #{criticq_forward.1} parent=0 // pred_check_branch
    %409 = sbr.rel (0) target = $region45
  $region44: #{criticq_forward.1} parent=0 // pred_region
    _
  $region45: #{criticq_forward.1} parent=0 // pred_fallthru
    _

</llo_original>
